<compile_context>
chip_gen: v7x
topology: tpu7x:2x2x1
jax: 0.10.0
libtpu: 0.0.40
codegen_flags: <defaults>
</compile_context>

<pallas_src>
import jax
import jax.numpy as jnp
from jax.experimental import pallas as pl
from jax.experimental.pallas import tpu as pltpu


def _add_kernel(a_ref, b_ref, o_ref):
    o_ref[...] = a_ref[...] + b_ref[...]


def _round_up(x, m):
    return ((x + m - 1) // m) * m


def _vmem_capacity_bytes():
    """Physical VMEM per core; conservative fallback if the query is unavailable."""
    try:
        return int(pltpu.get_tpu_info().vmem_capacity_bytes)
    except Exception:
        return 64 * 1024 * 1024  # v7x per-TC VMEM (most conservative)


def _target_block_bytes(vmem_cap):
    # Larger blocks on 128 MiB-VMEM parts (v5e/v6e), 4 MiB cap on v7x (64 MiB).
    if vmem_cap >= 128 * 1024 * 1024:
        return 16 * 1024 * 1024
    return 4 * 1024 * 1024


def _choose_layout(n, itemsize, target_block_bytes):
    """Pick a lane-dense 2-D slab (rows, lanes), row-block size and grid."""
    # Sublane multiple required by dtype packing (f32: 8, bf16: 16, int8/fp8: 32).
    sub = {8: 4, 4: 8, 2: 16, 1: 32}.get(itemsize, 8)

    # Widest lane count that divides n AND makes rows a multiple of `sub`
    # (avoids a masked sublane tail); fall back to the widest plain divisor,
    # then to a minimal pad.
    pad = 0
    lanes = None
    fallback = None
    for cand in (4096, 2048, 1024, 512, 256, 128):
        if n % cand == 0:
            if fallback is None:
                fallback = cand
            if (n // cand) % sub == 0:
                lanes = cand
                break
    if lanes is None:
        if fallback is not None:
            lanes = fallback
        else:
            lanes = 128
            pad = (-n) % lanes  # generic ragged-length fallback only
    rows = (n + pad) // lanes

    # Biggest block that fits the per-operand cap, rounded to a sublane multiple.
    row_bytes = lanes * itemsize
    max_block_rows = max(sub, (target_block_bytes // row_bytes // sub) * sub)

    if rows <= max_block_rows:
        # Small input: aim for 4 blocks (2 per TC on v7x + intra-core
        # pipelining), else 2, else 1.  Keep the block count small — each
        # grid step costs ~0.35 us.
        if rows >= 4 * sub:
            target_blocks = 4
        elif rows >= 2 * sub:
            target_blocks = 2
        else:
            target_blocks = 1
        block_rows = _round_up(pl.cdiv(rows, target_blocks), sub)
        if block_rows >= rows:
            block_rows = rows  # full-dim block is always layout-legal
    else:
        block_rows = max_block_rows

    grid = pl.cdiv(rows, block_rows)  # ragged last block handled by Pallas masking
    return lanes, pad, rows, block_rows, grid


def pallas_add(x67, x75, donate_first=False):
    """Elementwise add x67 + x75 (same shape/dtype) in a single Pallas TPU kernel."""
    assert x67.shape == x75.shape and x67.dtype == x75.dtype
    orig_shape = x67.shape
    dtype = x67.dtype

    n = 1
    for d in orig_shape:
        n *= d
    itemsize = jnp.dtype(dtype).itemsize

    vmem_cap = _vmem_capacity_bytes()
    target_block_bytes = _target_block_bytes(vmem_cap)
    lanes, pad, rows, block_rows, grid = _choose_layout(n, itemsize, target_block_bytes)

    a = x67.reshape(-1)
    b = x75.reshape(-1)
    if pad:
        # Generic fallback only (flat length not a multiple of 128).
        a = jnp.pad(a, (0, pad))
        b = jnp.pad(b, (0, pad))
    a = a.reshape(rows, lanes)
    b = b.reshape(rows, lanes)

    # VMEM budget: 3 operands x 2 pipeline buffers x block, plus headroom;
    # never exceeds ~90% of physical VMEM given the generation-aware block cap.
    block_bytes = block_rows * lanes * itemsize
    vmem_limit = min(6 * block_bytes + 4 * 1024 * 1024, (vmem_cap * 9) // 10)

    kwargs = {}
    if donate_first:
        kwargs["input_output_aliases"] = {0: 0}

    out = pl.pallas_call(
        _add_kernel,
        out_shape=jax.ShapeDtypeStruct((rows, lanes), dtype),
        grid=(grid,),
        in_specs=[
            pl.BlockSpec((block_rows, lanes), lambda i: (i, 0)),
            pl.BlockSpec((block_rows, lanes), lambda i: (i, 0)),
        ],
        out_specs=pl.BlockSpec((block_rows, lanes), lambda i: (i, 0)),
        compiler_params=pltpu.CompilerParams(
            dimension_semantics=("parallel",),
            vmem_limit_bytes=int(vmem_limit),
        ),
        **kwargs,
    )(a, b)

    flat = out.reshape(-1)
    if pad:
        flat = flat[:n]
    return flat.reshape(orig_shape)


if __name__ == "__main__":
    key = jax.random.PRNGKey(0)
    k1, k2 = jax.random.split(key)
    # Shape implied by the module's forward: (1, 512, 28, 28) f32 (~1.57 MiB/operand).
    shape = (1, 512, 28, 28)
    x67 = jax.random.normal(k1, shape, dtype=jnp.float32)
    x75 = jax.random.normal(k2, shape, dtype=jnp.float32)

    y = pallas_add(x67, x75)
    jax.block_until_ready(y)

    ref = x67 + x75
    assert y.shape == ref.shape
    assert jnp.allclose(y, ref, atol=1e-6, rtol=1e-6)
    print("KERNEL_OK")
</pallas_src>

<mosaic_0001>
module attributes {stable_mosaic.version = 11 : i64} {
  func.func @_add_kernel(%arg0: i32, %arg1: memref<104x1024xf32, #tpu.memory_space<vmem>>, %arg2: memref<104x1024xf32, #tpu.memory_space<vmem>>, %arg3: memref<104x1024xf32, #tpu.memory_space<vmem>>) attributes {dimension_semantics = [#tpu.dimension_semantics<parallel>], iteration_bounds = array<i64: 4>, scalar_prefetch = 0 : i64, scratch_operands = 0 : i64, tpu.core_type = #tpu.core_type<tc>, window_params = [{transform_indices = @transform_0, window_bounds = array<i64: 104, 1024>}, {transform_indices = @transform_1, window_bounds = array<i64: 104, 1024>}, {transform_indices = @transform_2, window_bounds = array<i64: 104, 1024>}]} {
    %c0 = arith.constant 0 : index
    %c0_0 = arith.constant 0 : index
    %0 = vector.load %arg1[%c0, %c0_0] : memref<104x1024xf32, #tpu.memory_space<vmem>>, vector<104x1024xf32>
    %c0_1 = arith.constant 0 : index
    %c0_2 = arith.constant 0 : index
    %1 = vector.load %arg2[%c0_1, %c0_2] : memref<104x1024xf32, #tpu.memory_space<vmem>>, vector<104x1024xf32>
    %2 = arith.addf %0, %1 : vector<104x1024xf32>
    %c0_3 = arith.constant 0 : index
    %c0_4 = arith.constant 0 : index
    %3 = vector.load %arg3[%c0_3, %c0_4] : memref<104x1024xf32, #tpu.memory_space<vmem>>, vector<104x1024xf32>
    tpu.vector_store %arg3[%c0_3, %c0_4], %2 {strides = array<i32>} : memref<104x1024xf32, #tpu.memory_space<vmem>>, vector<104x1024xf32>,
    return
  }
  func.func @transform_0(%arg0: i32) -> (i32, i32) {
    %c0_i32 = arith.constant 0 : i32
    %c0_i32_0 = arith.constant 0 : i32
    return %arg0, %c0_i32 : i32, i32
  }
  func.func @transform_1(%arg0: i32) -> (i32, i32) {
    %c0_i32 = arith.constant 0 : i32
    %c0_i32_0 = arith.constant 0 : i32
    return %arg0, %c0_i32 : i32, i32
  }
  func.func @transform_2(%arg0: i32) -> (i32, i32) {
    %c0_i32 = arith.constant 0 : i32
    %c0_i32_0 = arith.constant 0 : i32
    return %arg0, %c0_i32 : i32, i32
  }
}

</mosaic_0001>

<llo_original>
// kernel: tpu_custom_call.1
$region0: #{tpu_custom_call.1}
  #allocation0 [shape = 'u32[]', space=smem, size = 0x4, offset = 0x4, fixed_abs, tag = 'smem constant byte address 0x4 - core index']
  #allocation1 [shape = 'u32[144,128]{1,0:T(1,128)}', space=vmem, size = 0x12000, scoped, tag = 'internal scratch']
  %s0 = inlined_call_operand.hbm [shape: f32[392,1024], index: 0, kind: input, shape index: {}]
  %s1 = inlined_call_operand.hbm [shape: f32[392,1024], index: 1, kind: input, shape index: {}]
  %s2 = inlined_call_operand.hbm [shape: f32[392,1024], index: 2, kind: output, shape index: {}]
  %s3 = sld [smem:[#allocation0]]
  $region49: #{tpu_custom_call.1} parent=0
    _
  %s5 = ssub.s32 1, %s3
  %s6 = scalar_select 0, %s5, %s3
  $region1: #{tpu_custom_call.1} parent=0
    #allocation2 [shape = 'u8[851968]{0}', space=vmem, size = 0xd0000, scoped, tag = 'input window, operand 0']
    #allocation3 [shape = 's32[2]{0}', space=sflag, size = 0x8, scoped, tag = 'scoped memory for tpu_custom_call.1']
    #allocation4 [shape = 's32[2]{0}', space=sflag, size = 0x8, scoped, tag = 'scoped memory for tpu_custom_call.1']
    #allocation5 [shape = 'u8[851968]{0}', space=vmem, size = 0xd0000, scoped, tag = 'input window, operand 1']
    #allocation6 [shape = 's32[2]{0}', space=sflag, size = 0x8, scoped, tag = 'scoped memory for tpu_custom_call.1']
    #allocation7 [shape = 'u8[851968]{0}', space=vmem, size = 0xd0000, scoped, tag = 'output window, operand 0']
    %7 = vsyncpa [#allocation3], 0
    %s8 = scalar_lea.sflag [#allocation3], 1
    %9 = vsyncpa %s8, 0
    %10 = vsyncpa [#allocation6], 0
    %s11 = scalar_lea.sflag [#allocation6], 1
    %12 = vsyncpa %s11, 0
    %13 = vsyncpa [#allocation4], 0
    %s14 = scalar_lea.sflag [#allocation4], 1
    %15 = vsyncpa %s14, 0
    loop: start=0, step=1, limit=6
    $region2: #{tpu_custom_call.1} parent=1 // loop_pre_header
      _
    $region3: #{tpu_custom_call.1} parent=1 // loop_header
      %s17 = sphi 0, %s21
      %p18 = scmp.ge.s32.totalorder %s17, 6
      %s27 = sphi 0, %s29
      %s30 = sphi 0, %s27
      %s31 = sphi 0, %s30
      %s47 = sphi 0, %s31
      %s53 = sphi 0, %s55
      %s56 = sphi 0, %s53
      %s57 = sphi 0, %s56
      %s73 = sphi 0, %s57
      %s79 = sphi 0, %s81
      %s82 = sphi 0, %s79
      %s83 = sphi 0, %s82
      %s99 = sphi 0, %s83
    $region4: #{tpu_custom_call.1} parent=1 // loop_header_branch
      %20 = sbr.rel (%p18) target = $region8
    $region5: #{tpu_custom_call.1} parent=1 // loop_body
      %s22 = ssub.s32 %s17, 1
      %s23 = ssub.s32 %s17, 2
      %s24 = sadd.s32 %s17, 1
      %s25 = ssub.s32 %s17, %s24
      %p26 = scmp.eq.s32.totalorder %s25, 0
      %s28 = sadd.s32 %s27, 1
      %s29 = scalar_select %p26, %s27, %s28
      %p32 = pneg %p26
      %p33 = scmp.eq.s32.totalorder %s17, 3
      %p34 = por %p32, %p33
      %p35 = scmp.ne.s32.totalorder %s27, %s30
      %p36 = scmp.eq.s32.totalorder %s17, 0
      %p37 = por %p35, %p36
      %p38 = scmp.ne.s32.totalorder %s27, %s30
      %p39 = scmp.eq.s32.totalorder %s22, 3
      %p40 = por %p38, %p39
      %p41 = scmp.ne.s32.totalorder %s30, %s31
      %p42 = scmp.eq.s32.totalorder %s22, 0
      %p43 = por %p41, %p42
      %p44 = scmp.ne.s32.totalorder %s30, %s31
      %p45 = scmp.eq.s32.totalorder %s23, 3
      %p46 = por %p44, %p45
      %p48 = scmp.ne.s32.totalorder %s31, %s47
      %p49 = scmp.eq.s32.totalorder %s23, 0
      %p50 = por %p48, %p49
      %s51 = ssub.s32 %s17, %s24
      %p52 = scmp.eq.s32.totalorder %s51, 0
      %s54 = sadd.s32 %s53, 1
      %s55 = scalar_select %p52, %s53, %s54
      %p58 = pneg %p52
      %p59 = scmp.eq.s32.totalorder %s17, 3
      %p60 = por %p58, %p59
      %p61 = scmp.ne.s32.totalorder %s53, %s56
      %p62 = scmp.eq.s32.totalorder %s17, 0
      %p63 = por %p61, %p62
      %p64 = scmp.ne.s32.totalorder %s53, %s56
      %p65 = scmp.eq.s32.totalorder %s22, 3
      %p66 = por %p64, %p65
      %p67 = scmp.ne.s32.totalorder %s56, %s57
      %p68 = scmp.eq.s32.totalorder %s22, 0
      %p69 = por %p67, %p68
      %p70 = scmp.ne.s32.totalorder %s56, %s57
      %p71 = scmp.eq.s32.totalorder %s23, 3
      %p72 = por %p70, %p71
      %p74 = scmp.ne.s32.totalorder %s57, %s73
      %p75 = scmp.eq.s32.totalorder %s23, 0
      %p76 = por %p74, %p75
      %s77 = ssub.s32 %s17, %s24
      %p78 = scmp.eq.s32.totalorder %s77, 0
      %s80 = sadd.s32 %s79, 1
      %s81 = scalar_select %p78, %s79, %s80
      %p84 = pneg %p78
      %p85 = scmp.eq.s32.totalorder %s17, 3
      %p86 = por %p84, %p85
      %p87 = scmp.ne.s32.totalorder %s79, %s82
      %p88 = scmp.eq.s32.totalorder %s17, 0
      %p89 = por %p87, %p88
      %p90 = scmp.ne.s32.totalorder %s79, %s82
      %p91 = scmp.eq.s32.totalorder %s22, 3
      %p92 = por %p90, %p91
      %p93 = scmp.ne.s32.totalorder %s82, %s83
      %p94 = scmp.eq.s32.totalorder %s22, 0
      %p95 = por %p93, %p94
      %p96 = scmp.ne.s32.totalorder %s82, %s83
      %p97 = scmp.eq.s32.totalorder %s23, 3
      %p98 = por %p96, %p97
      %p100 = scmp.ne.s32.totalorder %s83, %s99
      %p101 = scmp.eq.s32.totalorder %s23, 0
      %p102 = por %p100, %p101
      %p103 = scmp.le.s32.totalorder 1, %s17
      %p104 = scmp.lt.s32.totalorder %s17, 5
      %p105 = pnand %p103, %p104
      %p106 = pneg %p105
      // Predicated region
      $region9: #{tpu_custom_call.1} parent=5 // pred_check
        _
      $region10: #{tpu_custom_call.1} parent=5 // pred_check_branch
        %108 = sbr.rel (%p105) target = $region12
      $region11: #{tpu_custom_call.1} parent=5 // pred_region
        %s109 = ssub.s32 %s17, 1
      $region12: #{tpu_custom_call.1} parent=5 // pred_fallthru
        _
      %p110 = scmp.lt.s32.totalorder %s17, 4
      // Predicated region
      $region13: #{tpu_custom_call.1} parent=5 // pred_check
        %p111 = pneg %p110
      $region14: #{tpu_custom_call.1} parent=5 // pred_check_branch
        %113 = sbr.rel (%p111) target = $region16
      $region15: #{tpu_custom_call.1} parent=5 // pred_region
        // Predicated region
        $region17: #{tpu_custom_call.1} parent=15 // pred_check
          %p114 = pneg %p37
        $region18: #{tpu_custom_call.1} parent=15 // pred_check_branch
          %116 = sbr.rel (%p114) target = $region20
        $region19: #{tpu_custom_call.1} parent=15 // pred_region
          %s117 = sand.u32 %s27, 1
          %s118 = scalar_lea.sflag [#allocation3], %s117
          %s119 = sand.u32 %s27, 1
          %s120 = smul.addr %s119, 832
          %s121 = scalar_lea.vmem [#allocation2], %s120
          %s122 = smul.u32 13, %s17
          %s123 = ssub.s32 49, %s122
          %p124 = scmp.lt.s32.totalorder %s123, 13
          %s125 = scalar_select %p124, %s123, 13
          %s126 = smul.u32 128, %s125
          %s127 = smul.u32 %s126, 8
          %s129 = ssub.s32 13312, %s127
          %130 = vsyncadd %s118, %s129
          %p131 = scmp.ne.s32.totalorder 0, %s127
          %s132 = smul.addr %s122, 8
          %s133 = smul.addr %s132, 128
          %s134 = scalar_lea.hbm %s0, %s133
          %s135 = smul.u32 64, %s125
          %s136 = sshll.u32 %s121, 4
          %s137 = int_to_ptr.vmem [resolvable:$true] %s136
          %s138 = sshll.u32 %s135, 4
          %142 = dma.hbm_to_vmem [thread:$0]  (%p131), %s134, %s138, %s137, %s118, 1024, 1024, 64
        $region20: #{tpu_custom_call.1} parent=15 // pred_fallthru
          _
        // Predicated region
        $region21: #{tpu_custom_call.1} parent=15 // pred_check
          %p143 = pneg %p63
        $region22: #{tpu_custom_call.1} parent=15 // pred_check_branch
          %145 = sbr.rel (%p143) target = $region24
        $region23: #{tpu_custom_call.1} parent=15 // pred_region
          %s146 = sand.u32 %s53, 1
          %s147 = scalar_lea.sflag [#allocation6], %s146
          %s148 = sand.u32 %s53, 1
          %s149 = smul.addr %s148, 832
          %s150 = scalar_lea.vmem [#allocation5], %s149
          %s151 = smul.u32 13, %s17
          %s152 = ssub.s32 49, %s151
          %p153 = scmp.lt.s32.totalorder %s152, 13
          %s154 = scalar_select %p153, %s152, 13
          %s155 = smul.u32 128, %s154
          %s156 = smul.u32 %s155, 8
          %s158 = ssub.s32 13312, %s156
          %159 = vsyncadd %s147, %s158
          %p160 = scmp.ne.s32.totalorder 0, %s156
          %s161 = smul.addr %s151, 8
          %s162 = smul.addr %s161, 128
          %s163 = scalar_lea.hbm %s1, %s162
          %s164 = smul.u32 64, %s154
          %s165 = sshll.u32 %s150, 4
          %s166 = int_to_ptr.vmem [resolvable:$true] %s165
          %s167 = sshll.u32 %s164, 4
          %171 = dma.hbm_to_vmem [thread:$0]  (%p160), %s163, %s167, %s166, %s147, 1024, 1024, 64
        $region24: #{tpu_custom_call.1} parent=15 // pred_fallthru
          _
      $region16: #{tpu_custom_call.1} parent=5 // pred_fallthru
        _
      %p172 = scmp.le.s32.totalorder 1, %s17
      %p173 = scmp.lt.s32.totalorder %s17, 5
      %p174 = pnand %p172, %p173
      %p175 = pneg %p174
      // Predicated region
      $region25: #{tpu_custom_call.1} parent=5 // pred_check
        _
      $region26: #{tpu_custom_call.1} parent=5 // pred_check_branch
        %177 = sbr.rel (%p174) target = $region28
      $region27: #{tpu_custom_call.1} parent=5 // pred_region
        %s178 = ssub.s32 %s17, 1
        %s179 = sand.u32 %s30, 1
        %s180 = scalar_lea.sflag [#allocation3], %s179
        %s181 = sand.u32 %s30, 1
        %s182 = smul.addr %s181, 832
        %s183 = scalar_lea.vmem [#allocation2], %s182
        // Predicated region
        $region29: #{tpu_custom_call.1} parent=27 // pred_check
          %p184 = pneg %p43
        $region30: #{tpu_custom_call.1} parent=27 // pred_check_branch
          %186 = sbr.rel (%p184) target = $region32
        $region31: #{tpu_custom_call.1} parent=27 // pred_region
          %187 = dma.done %s180, 13312
        $region32: #{tpu_custom_call.1} parent=27 // pred_fallthru
          _
        %s188 = sand.u32 %s56, 1
        %s189 = scalar_lea.sflag [#allocation6], %s188
        %s190 = sand.u32 %s56, 1
        %s191 = smul.addr %s190, 832
        %s192 = scalar_lea.vmem [#allocation5], %s191
        // Predicated region
        $region33: #{tpu_custom_call.1} parent=27 // pred_check
          %p193 = pneg %p69
        $region34: #{tpu_custom_call.1} parent=27 // pred_check_branch
          %195 = sbr.rel (%p193) target = $region36
        $region35: #{tpu_custom_call.1} parent=27 // pred_region
          %196 = dma.done %s189, 13312
        $region36: #{tpu_custom_call.1} parent=27 // pred_fallthru
          _
        %s197 = sand.u32 %s30, 1
        %s198 = scalar_lea.sflag [#allocation3], %s197
        %s199 = sand.u32 %s30, 1
        %s200 = smul.addr %s199, 832
        %s201 = scalar_lea.vmem [#allocation2], %s200
        %p202 = pneg %p43
        %p203 = pneg %p40
        %s204 = sand.u32 %s56, 1
        %s205 = scalar_lea.sflag [#allocation6], %s204
        %s206 = sand.u32 %s56, 1
        %s207 = smul.addr %s206, 832
        %s208 = scalar_lea.vmem [#allocation5], %s207
        %p209 = pneg %p69
        %p210 = pneg %p66
        %p211 = pneg %p95
        %p212 = pneg %p92
        %s213 = sand.u32 %s82, 1
        %s214 = scalar_lea.sflag [#allocation4], %s213
        %s215 = sand.u32 %s82, 1
        %s216 = smul.addr %s215, 832
        %s217 = scalar_lea.vmem [#allocation7], %s216
        %s218 = smul.u32 13, %s22
        %s219 = ssub.s32 49, %s218
        %p220 = scmp.lt.s32.totalorder %s219, 13
        %s221 = scalar_select %p220, %s219, 13
        %s222 = smul.u32 128, %s221
        %s223 = smul.u32 %s222, 8
        %s224 = smul.u32 13, %s22
        %s225 = ssub.s32 49, %s224
        %p226 = scmp.lt.s32.totalorder %s225, 13
        %s227 = scalar_select %p226, %s225, 13
        %s228 = smul.u32 128, %s227
        %s229 = smul.u32 %s228, 8
        %s230 = smul.u32 13, %s22
        %s231 = ssub.s32 49, %s230
        %p232 = scmp.lt.s32.totalorder %s231, 13
        %s233 = scalar_select %p232, %s231, 13
        %s234 = smul.u32 128, %s233
        %s235 = smul.u32 %s234, 8
        %v236 = vld [vmem:[%s183] sm:$0xff]
        %v237 = vld [vmem:[%s183 + $0x8] sm:$0xff]
        %v238 = vld [vmem:[%s183 + $0x10] sm:$0xff]
        %v239 = vld [vmem:[%s183 + $0x18] sm:$0xff]
        %v240 = vld [vmem:[%s183 + $0x20] sm:$0xff]
        %v241 = vld [vmem:[%s183 + $0x28] sm:$0xff]
        %v242 = vld [vmem:[%s183 + $0x30] sm:$0xff]
        %v243 = vld [vmem:[%s183 + $0x38] sm:$0xff]
        %v244 = vld [vmem:[%s183 + $0x40] sm:$0xff]
        %v245 = vld [vmem:[%s183 + $0x48] sm:$0xff]
        %v246 = vld [vmem:[%s183 + $0x50] sm:$0xff]
        %v247 = vld [vmem:[%s183 + $0x58] sm:$0xff]
        %v248 = vld [vmem:[%s183 + $0x60] sm:$0xff]
        %v249 = vld [vmem:[%s183 + $0x68] sm:$0xff]
        %v250 = vld [vmem:[%s183 + $0x70] sm:$0xff]
        %v251 = vld [vmem:[%s183 + $0x78] sm:$0xff]
        %v252 = vld [vmem:[%s183 + $0x80] sm:$0xff]
        %v253 = vld [vmem:[%s183 + $0x88] sm:$0xff]
        %v254 = vld [vmem:[%s183 + $0x90] sm:$0xff]
        %v255 = vld [vmem:[%s183 + $0x98] sm:$0xff]
        %v256 = vld [vmem:[%s183 + $0xa0] sm:$0xff]
        %v257 = vld [vmem:[%s183 + $0xa8] sm:$0xff]
        %v258 = vld [vmem:[%s183 + $0xb0] sm:$0xff]
        %v259 = vld [vmem:[%s183 + $0xb8] sm:$0xff]
        %v260 = vld [vmem:[%s183 + $0xc0] sm:$0xff]
        %v261 = vld [vmem:[%s183 + $0xc8] sm:$0xff]
        %v262 = vld [vmem:[%s183 + $0xd0] sm:$0xff]
        %v263 = vld [vmem:[%s183 + $0xd8] sm:$0xff]
        %v264 = vld [vmem:[%s183 + $0xe0] sm:$0xff]
        %v265 = vld [vmem:[%s183 + $0xe8] sm:$0xff]
        %v266 = vld [vmem:[%s183 + $0xf0] sm:$0xff]
        %v267 = vld [vmem:[%s183 + $0xf8] sm:$0xff]
        %v268 = vld [vmem:[%s183 + $0x100] sm:$0xff]
        %v269 = vld [vmem:[%s183 + $0x108] sm:$0xff]
        %v270 = vld [vmem:[%s183 + $0x110] sm:$0xff]
        %v271 = vld [vmem:[%s183 + $0x118] sm:$0xff]
        %v272 = vld [vmem:[%s183 + $0x120] sm:$0xff]
        %v273 = vld [vmem:[%s183 + $0x128] sm:$0xff]
        %v274 = vld [vmem:[%s183 + $0x130] sm:$0xff]
        %v275 = vld [vmem:[%s183 + $0x138] sm:$0xff]
        %v276 = vld [vmem:[%s183 + $0x140] sm:$0xff]
        %v277 = vld [vmem:[%s183 + $0x148] sm:$0xff]
        %v278 = vld [vmem:[%s183 + $0x150] sm:$0xff]
        %v279 = vld [vmem:[%s183 + $0x158] sm:$0xff]
        %v280 = vld [vmem:[%s183 + $0x160] sm:$0xff]
        %v281 = vld [vmem:[%s183 + $0x168] sm:$0xff]
        %v282 = vld [vmem:[%s183 + $0x170] sm:$0xff]
        %v283 = vld [vmem:[%s183 + $0x178] sm:$0xff]
        %v284 = vld [vmem:[%s183 + $0x180] sm:$0xff]
        %v285 = vld [vmem:[%s183 + $0x188] sm:$0xff]
        %v286 = vld [vmem:[%s183 + $0x190] sm:$0xff]
        %v287 = vld [vmem:[%s183 + $0x198] sm:$0xff]
        %v288 = vld [vmem:[%s183 + $0x1a0] sm:$0xff]
        %v289 = vld [vmem:[%s183 + $0x1a8] sm:$0xff]
        %v290 = vld [vmem:[%s183 + $0x1b0] sm:$0xff]
        %v291 = vld [vmem:[%s183 + $0x1b8] sm:$0xff]
        %v292 = vld [vmem:[%s183 + $0x1c0] sm:$0xff]
        %v293 = vld [vmem:[%s183 + $0x1c8] sm:$0xff]
        %v294 = vld [vmem:[%s183 + $0x1d0] sm:$0xff]
        %v295 = vld [vmem:[%s183 + $0x1d8] sm:$0xff]
        %v296 = vld [vmem:[%s183 + $0x1e0] sm:$0xff]
        %v297 = vld [vmem:[%s183 + $0x1e8] sm:$0xff]
        %v298 = vld [vmem:[%s183 + $0x1f0] sm:$0xff]
        %v299 = vld [vmem:[%s183 + $0x1f8] sm:$0xff]
        %v300 = vld [vmem:[%s183 + $0x200] sm:$0xff]
        %v301 = vld [vmem:[%s183 + $0x208] sm:$0xff]
        %v302 = vld [vmem:[%s183 + $0x210] sm:$0xff]
        %v303 = vld [vmem:[%s183 + $0x218] sm:$0xff]
        %v304 = vld [vmem:[%s183 + $0x220] sm:$0xff]
        %v305 = vld [vmem:[%s183 + $0x228] sm:$0xff]
        %v306 = vld [vmem:[%s183 + $0x230] sm:$0xff]
        %v307 = vld [vmem:[%s183 + $0x238] sm:$0xff]
        %v308 = vld [vmem:[%s183 + $0x240] sm:$0xff]
        %v309 = vld [vmem:[%s183 + $0x248] sm:$0xff]
        %v310 = vld [vmem:[%s183 + $0x250] sm:$0xff]
        %v311 = vld [vmem:[%s183 + $0x258] sm:$0xff]
        %v312 = vld [vmem:[%s183 + $0x260] sm:$0xff]
        %v313 = vld [vmem:[%s183 + $0x268] sm:$0xff]
        %v314 = vld [vmem:[%s183 + $0x270] sm:$0xff]
        %v315 = vld [vmem:[%s183 + $0x278] sm:$0xff]
        %v316 = vld [vmem:[%s183 + $0x280] sm:$0xff]
        %v317 = vld [vmem:[%s183 + $0x288] sm:$0xff]
        %v318 = vld [vmem:[%s183 + $0x290] sm:$0xff]
        %v319 = vld [vmem:[%s183 + $0x298] sm:$0xff]
        %v320 = vld [vmem:[%s183 + $0x2a0] sm:$0xff]
        %v321 = vld [vmem:[%s183 + $0x2a8] sm:$0xff]
        %v322 = vld [vmem:[%s183 + $0x2b0] sm:$0xff]
        %v323 = vld [vmem:[%s183 + $0x2b8] sm:$0xff]
        %v324 = vld [vmem:[%s183 + $0x2c0] sm:$0xff]
        %v325 = vld [vmem:[%s183 + $0x2c8] sm:$0xff]
        %v326 = vld [vmem:[%s183 + $0x2d0] sm:$0xff]
        %v327 = vld [vmem:[%s183 + $0x2d8] sm:$0xff]
        %v328 = vld [vmem:[%s183 + $0x2e0] sm:$0xff]
        %v329 = vld [vmem:[%s183 + $0x2e8] sm:$0xff]
        %v330 = vld [vmem:[%s183 + $0x2f0] sm:$0xff]
        %v331 = vld [vmem:[%s183 + $0x2f8] sm:$0xff]
        %v332 = vld [vmem:[%s183 + $0x300] sm:$0xff]
        %v333 = vld [vmem:[%s183 + $0x308] sm:$0xff]
        %v334 = vld [vmem:[%s183 + $0x310] sm:$0xff]
        %v335 = vld [vmem:[%s183 + $0x318] sm:$0xff]
        %v336 = vld [vmem:[%s183 + $0x320] sm:$0xff]
        %v337 = vld [vmem:[%s183 + $0x328] sm:$0xff]
        %v338 = vld [vmem:[%s183 + $0x330] sm:$0xff]
        %v339 = vld [vmem:[%s183 + $0x338] sm:$0xff]
        %v340 = vld [vmem:[%s192] sm:$0xff]
        %v341 = vld [vmem:[%s192 + $0x8] sm:$0xff]
        %v342 = vld [vmem:[%s192 + $0x10] sm:$0xff]
        %v343 = vld [vmem:[%s192 + $0x18] sm:$0xff]
        %v344 = vld [vmem:[%s192 + $0x20] sm:$0xff]
        %v345 = vld [vmem:[%s192 + $0x28] sm:$0xff]
        %v346 = vld [vmem:[%s192 + $0x30] sm:$0xff]
        %v347 = vld [vmem:[%s192 + $0x38] sm:$0xff]
        %v348 = vld [vmem:[%s192 + $0x40] sm:$0xff]
        %v349 = vld [vmem:[%s192 + $0x48] sm:$0xff]
        %v350 = vld [vmem:[%s192 + $0x50] sm:$0xff]
        %v351 = vld [vmem:[%s192 + $0x58] sm:$0xff]
        %v352 = vld [vmem:[%s192 + $0x60] sm:$0xff]
        %v353 = vld [vmem:[%s192 + $0x68] sm:$0xff]
        %v354 = vld [vmem:[%s192 + $0x70] sm:$0xff]
        %v355 = vld [vmem:[%s192 + $0x78] sm:$0xff]
        %v356 = vld [vmem:[%s192 + $0x80] sm:$0xff]
        %v357 = vld [vmem:[%s192 + $0x88] sm:$0xff]
        %v358 = vld [vmem:[%s192 + $0x90] sm:$0xff]
        %v359 = vld [vmem:[%s192 + $0x98] sm:$0xff]
        %v360 = vld [vmem:[%s192 + $0xa0] sm:$0xff]
        %v361 = vld [vmem:[%s192 + $0xa8] sm:$0xff]
        %v362 = vld [vmem:[%s192 + $0xb0] sm:$0xff]
        %v363 = vld [vmem:[%s192 + $0xb8] sm:$0xff]
        %v364 = vld [vmem:[%s192 + $0xc0] sm:$0xff]
        %v365 = vld [vmem:[%s192 + $0xc8] sm:$0xff]
        %v366 = vld [vmem:[%s192 + $0xd0] sm:$0xff]
        %v367 = vld [vmem:[%s192 + $0xd8] sm:$0xff]
        %v368 = vld [vmem:[%s192 + $0xe0] sm:$0xff]
        %v369 = vld [vmem:[%s192 + $0xe8] sm:$0xff]
        %v370 = vld [vmem:[%s192 + $0xf0] sm:$0xff]
        %v371 = vld [vmem:[%s192 + $0xf8] sm:$0xff]
        %v372 = vld [vmem:[%s192 + $0x100] sm:$0xff]
        %v373 = vld [vmem:[%s192 + $0x108] sm:$0xff]
        %v374 = vld [vmem:[%s192 + $0x110] sm:$0xff]
        %v375 = vld [vmem:[%s192 + $0x118] sm:$0xff]
        %v376 = vld [vmem:[%s192 + $0x120] sm:$0xff]
        %v377 = vld [vmem:[%s192 + $0x128] sm:$0xff]
        %v378 = vld [vmem:[%s192 + $0x130] sm:$0xff]
        %v379 = vld [vmem:[%s192 + $0x138] sm:$0xff]
        %v380 = vld [vmem:[%s192 + $0x140] sm:$0xff]
        %v381 = vld [vmem:[%s192 + $0x148] sm:$0xff]
        %v382 = vld [vmem:[%s192 + $0x150] sm:$0xff]
        %v383 = vld [vmem:[%s192 + $0x158] sm:$0xff]
        %v384 = vld [vmem:[%s192 + $0x160] sm:$0xff]
        %v385 = vld [vmem:[%s192 + $0x168] sm:$0xff]
        %v386 = vld [vmem:[%s192 + $0x170] sm:$0xff]
        %v387 = vld [vmem:[%s192 + $0x178] sm:$0xff]
        %v388 = vld [vmem:[%s192 + $0x180] sm:$0xff]
        %v389 = vld [vmem:[%s192 + $0x188] sm:$0xff]
        %v390 = vld [vmem:[%s192 + $0x190] sm:$0xff]
        %v391 = vld [vmem:[%s192 + $0x198] sm:$0xff]
        %v392 = vld [vmem:[%s192 + $0x1a0] sm:$0xff]
        %v393 = vld [vmem:[%s192 + $0x1a8] sm:$0xff]
        %v394 = vld [vmem:[%s192 + $0x1b0] sm:$0xff]
        %v395 = vld [vmem:[%s192 + $0x1b8] sm:$0xff]
        %v396 = vld [vmem:[%s192 + $0x1c0] sm:$0xff]
        %v397 = vld [vmem:[%s192 + $0x1c8] sm:$0xff]
        %v398 = vld [vmem:[%s192 + $0x1d0] sm:$0xff]
        %v399 = vld [vmem:[%s192 + $0x1d8] sm:$0xff]
        %v400 = vld [vmem:[%s192 + $0x1e0] sm:$0xff]
        %v401 = vld [vmem:[%s192 + $0x1e8] sm:$0xff]
        %v402 = vld [vmem:[%s192 + $0x1f0] sm:$0xff]
        %v403 = vld [vmem:[%s192 + $0x1f8] sm:$0xff]
        %v404 = vld [vmem:[%s192 + $0x200] sm:$0xff]
        %v405 = vld [vmem:[%s192 + $0x208] sm:$0xff]
        %v406 = vld [vmem:[%s192 + $0x210] sm:$0xff]
        %v407 = vld [vmem:[%s192 + $0x218] sm:$0xff]
        %v408 = vld [vmem:[%s192 + $0x220] sm:$0xff]
        %v409 = vld [vmem:[%s192 + $0x228] sm:$0xff]
        %v410 = vld [vmem:[%s192 + $0x230] sm:$0xff]
        %v411 = vld [vmem:[%s192 + $0x238] sm:$0xff]
        %v412 = vld [vmem:[%s192 + $0x240] sm:$0xff]
        %v413 = vld [vmem:[%s192 + $0x248] sm:$0xff]
        %v414 = vld [vmem:[%s192 + $0x250] sm:$0xff]
        %v415 = vld [vmem:[%s192 + $0x258] sm:$0xff]
        %v416 = vld [vmem:[%s192 + $0x260] sm:$0xff]
        %v417 = vld [vmem:[%s192 + $0x268] sm:$0xff]
        %v418 = vld [vmem:[%s192 + $0x270] sm:$0xff]
        %v419 = vld [vmem:[%s192 + $0x278] sm:$0xff]
        %v420 = vld [vmem:[%s192 + $0x280] sm:$0xff]
        %v421 = vld [vmem:[%s192 + $0x288] sm:$0xff]
        %v422 = vld [vmem:[%s192 + $0x290] sm:$0xff]
        %v423 = vld [vmem:[%s192 + $0x298] sm:$0xff]
        %v424 = vld [vmem:[%s192 + $0x2a0] sm:$0xff]
        %v425 = vld [vmem:[%s192 + $0x2a8] sm:$0xff]
        %v426 = vld [vmem:[%s192 + $0x2b0] sm:$0xff]
        %v427 = vld [vmem:[%s192 + $0x2b8] sm:$0xff]
        %v428 = vld [vmem:[%s192 + $0x2c0] sm:$0xff]
        %v429 = vld [vmem:[%s192 + $0x2c8] sm:$0xff]
        %v430 = vld [vmem:[%s192 + $0x2d0] sm:$0xff]
        %v431 = vld [vmem:[%s192 + $0x2d8] sm:$0xff]
        %v432 = vld [vmem:[%s192 + $0x2e0] sm:$0xff]
        %v433 = vld [vmem:[%s192 + $0x2e8] sm:$0xff]
        %v434 = vld [vmem:[%s192 + $0x2f0] sm:$0xff]
        %v435 = vld [vmem:[%s192 + $0x2f8] sm:$0xff]
        %v436 = vld [vmem:[%s192 + $0x300] sm:$0xff]
        %v437 = vld [vmem:[%s192 + $0x308] sm:$0xff]
        %v438 = vld [vmem:[%s192 + $0x310] sm:$0xff]
        %v439 = vld [vmem:[%s192 + $0x318] sm:$0xff]
        %v440 = vld [vmem:[%s192 + $0x320] sm:$0xff]
        %v441 = vld [vmem:[%s192 + $0x328] sm:$0xff]
        %v442 = vld [vmem:[%s192 + $0x330] sm:$0xff]
        %v443 = vld [vmem:[%s192 + $0x338] sm:$0xff]
        %v444 = vadd.f32 %v236, %v340
        %v445 = vadd.f32 %v237, %v341
        %v446 = vadd.f32 %v238, %v342
        %v447 = vadd.f32 %v239, %v343
        %v448 = vadd.f32 %v240, %v344
        %v449 = vadd.f32 %v241, %v345
        %v450 = vadd.f32 %v242, %v346
        %v451 = vadd.f32 %v243, %v347
        %v452 = vadd.f32 %v244, %v348
        %v453 = vadd.f32 %v245, %v349
        %v454 = vadd.f32 %v246, %v350
        %v455 = vadd.f32 %v247, %v351
        %v456 = vadd.f32 %v248, %v352
        %v457 = vadd.f32 %v249, %v353
        %v458 = vadd.f32 %v250, %v354
        %v459 = vadd.f32 %v251, %v355
        %v460 = vadd.f32 %v252, %v356
        %v461 = vadd.f32 %v253, %v357
        %v462 = vadd.f32 %v254, %v358
        %v463 = vadd.f32 %v255, %v359
        %v464 = vadd.f32 %v256, %v360
        %v465 = vadd.f32 %v257, %v361
        %v466 = vadd.f32 %v258, %v362
        %v467 = vadd.f32 %v259, %v363
        %v468 = vadd.f32 %v260, %v364
        %v469 = vadd.f32 %v261, %v365
        %v470 = vadd.f32 %v262, %v366
        %v471 = vadd.f32 %v263, %v367
        %v472 = vadd.f32 %v264, %v368
        %v473 = vadd.f32 %v265, %v369
        %v474 = vadd.f32 %v266, %v370
        %v475 = vadd.f32 %v267, %v371
        %v476 = vadd.f32 %v268, %v372
        %v477 = vadd.f32 %v269, %v373
        %v478 = vadd.f32 %v270, %v374
        %v479 = vadd.f32 %v271, %v375
        %v480 = vadd.f32 %v272, %v376
        %v481 = vadd.f32 %v273, %v377
        %v482 = vadd.f32 %v274, %v378
        %v483 = vadd.f32 %v275, %v379
        %v484 = vadd.f32 %v276, %v380
        %v485 = vadd.f32 %v277, %v381
        %v486 = vadd.f32 %v278, %v382
        %v487 = vadd.f32 %v279, %v383
        %v488 = vadd.f32 %v280, %v384
        %v489 = vadd.f32 %v281, %v385
        %v490 = vadd.f32 %v282, %v386
        %v491 = vadd.f32 %v283, %v387
        %v492 = vadd.f32 %v284, %v388
        %v493 = vadd.f32 %v285, %v389
        %v494 = vadd.f32 %v286, %v390
        %v495 = vadd.f32 %v287, %v391
        %v496 = vadd.f32 %v288, %v392
        %v497 = vadd.f32 %v289, %v393
        %v498 = vadd.f32 %v290, %v394
        %v499 = vadd.f32 %v291, %v395
        %v500 = vadd.f32 %v292, %v396
        %v501 = vadd.f32 %v293, %v397
        %v502 = vadd.f32 %v294, %v398
        %v503 = vadd.f32 %v295, %v399
        %v504 = vadd.f32 %v296, %v400
        %v505 = vadd.f32 %v297, %v401
        %v506 = vadd.f32 %v298, %v402
        %v507 = vadd.f32 %v299, %v403
        %v508 = vadd.f32 %v300, %v404
        %v509 = vadd.f32 %v301, %v405
        %v510 = vadd.f32 %v302, %v406
        %v511 = vadd.f32 %v303, %v407
        %v512 = vadd.f32 %v304, %v408
        %v513 = vadd.f32 %v305, %v409
        %v514 = vadd.f32 %v306, %v410
        %v515 = vadd.f32 %v307, %v411
        %v516 = vadd.f32 %v308, %v412
        %v517 = vadd.f32 %v309, %v413
        %v518 = vadd.f32 %v310, %v414
        %v519 = vadd.f32 %v311, %v415
        %v520 = vadd.f32 %v312, %v416
        %v521 = vadd.f32 %v313, %v417
        %v522 = vadd.f32 %v314, %v418
        %v523 = vadd.f32 %v315, %v419
        %v524 = vadd.f32 %v316, %v420
        %v525 = vadd.f32 %v317, %v421
        %v526 = vadd.f32 %v318, %v422
        %v527 = vadd.f32 %v319, %v423
        %v528 = vadd.f32 %v320, %v424
        %v529 = vadd.f32 %v321, %v425
        %v530 = vadd.f32 %v322, %v426
        %v531 = vadd.f32 %v323, %v427
        %v532 = vadd.f32 %v324, %v428
        %v533 = vadd.f32 %v325, %v429
        %v534 = vadd.f32 %v326, %v430
        %v535 = vadd.f32 %v327, %v431
        %v536 = vadd.f32 %v328, %v432
        %v537 = vadd.f32 %v329, %v433
        %v538 = vadd.f32 %v330, %v434
        %v539 = vadd.f32 %v331, %v435
        %v540 = vadd.f32 %v332, %v436
        %v541 = vadd.f32 %v333, %v437
        %v542 = vadd.f32 %v334, %v438
        %v543 = vadd.f32 %v335, %v439
        %v544 = vadd.f32 %v336, %v440
        %v545 = vadd.f32 %v337, %v441
        %v546 = vadd.f32 %v338, %v442
        %v547 = vadd.f32 %v339, %v443
        %548 = vst [vmem:[%s217] sm:$0xff] %v444
        %549 = vst [vmem:[%s217 + $0x8] sm:$0xff] %v445
        %550 = vst [vmem:[%s217 + $0x10] sm:$0xff] %v446
        %551 = vst [vmem:[%s217 + $0x18] sm:$0xff] %v447
        %552 = vst [vmem:[%s217 + $0x20] sm:$0xff] %v448
        %553 = vst [vmem:[%s217 + $0x28] sm:$0xff] %v449
        %554 = vst [vmem:[%s217 + $0x30] sm:$0xff] %v450
        %555 = vst [vmem:[%s217 + $0x38] sm:$0xff] %v451
        %556 = vst [vmem:[%s217 + $0x40] sm:$0xff] %v452
        %557 = vst [vmem:[%s217 + $0x48] sm:$0xff] %v453
        %558 = vst [vmem:[%s217 + $0x50] sm:$0xff] %v454
        %559 = vst [vmem:[%s217 + $0x58] sm:$0xff] %v455
        %560 = vst [vmem:[%s217 + $0x60] sm:$0xff] %v456
        %561 = vst [vmem:[%s217 + $0x68] sm:$0xff] %v457
        %562 = vst [vmem:[%s217 + $0x70] sm:$0xff] %v458
        %563 = vst [vmem:[%s217 + $0x78] sm:$0xff] %v459
        %564 = vst [vmem:[%s217 + $0x80] sm:$0xff] %v460
        %565 = vst [vmem:[%s217 + $0x88] sm:$0xff] %v461
        %566 = vst [vmem:[%s217 + $0x90] sm:$0xff] %v462
        %567 = vst [vmem:[%s217 + $0x98] sm:$0xff] %v463
        %568 = vst [vmem:[%s217 + $0xa0] sm:$0xff] %v464
        %569 = vst [vmem:[%s217 + $0xa8] sm:$0xff] %v465
        %570 = vst [vmem:[%s217 + $0xb0] sm:$0xff] %v466
        %571 = vst [vmem:[%s217 + $0xb8] sm:$0xff] %v467
        %572 = vst [vmem:[%s217 + $0xc0] sm:$0xff] %v468
        %573 = vst [vmem:[%s217 + $0xc8] sm:$0xff] %v469
        %574 = vst [vmem:[%s217 + $0xd0] sm:$0xff] %v470
        %575 = vst [vmem:[%s217 + $0xd8] sm:$0xff] %v471
        %576 = vst [vmem:[%s217 + $0xe0] sm:$0xff] %v472
        %577 = vst [vmem:[%s217 + $0xe8] sm:$0xff] %v473
        %578 = vst [vmem:[%s217 + $0xf0] sm:$0xff] %v474
        %579 = vst [vmem:[%s217 + $0xf8] sm:$0xff] %v475
        %580 = vst [vmem:[%s217 + $0x100] sm:$0xff] %v476
        %581 = vst [vmem:[%s217 + $0x108] sm:$0xff] %v477
        %582 = vst [vmem:[%s217 + $0x110] sm:$0xff] %v478
        %583 = vst [vmem:[%s217 + $0x118] sm:$0xff] %v479
        %584 = vst [vmem:[%s217 + $0x120] sm:$0xff] %v480
        %585 = vst [vmem:[%s217 + $0x128] sm:$0xff] %v481
        %586 = vst [vmem:[%s217 + $0x130] sm:$0xff] %v482
        %587 = vst [vmem:[%s217 + $0x138] sm:$0xff] %v483
        %588 = vst [vmem:[%s217 + $0x140] sm:$0xff] %v484
        %589 = vst [vmem:[%s217 + $0x148] sm:$0xff] %v485
        %590 = vst [vmem:[%s217 + $0x150] sm:$0xff] %v486
        %591 = vst [vmem:[%s217 + $0x158] sm:$0xff] %v487
        %592 = vst [vmem:[%s217 + $0x160] sm:$0xff] %v488
        %593 = vst [vmem:[%s217 + $0x168] sm:$0xff] %v489
        %594 = vst [vmem:[%s217 + $0x170] sm:$0xff] %v490
        %595 = vst [vmem:[%s217 + $0x178] sm:$0xff] %v491
        %596 = vst [vmem:[%s217 + $0x180] sm:$0xff] %v492
        %597 = vst [vmem:[%s217 + $0x188] sm:$0xff] %v493
        %598 = vst [vmem:[%s217 + $0x190] sm:$0xff] %v494
        %599 = vst [vmem:[%s217 + $0x198] sm:$0xff] %v495
        %600 = vst [vmem:[%s217 + $0x1a0] sm:$0xff] %v496
        %601 = vst [vmem:[%s217 + $0x1a8] sm:$0xff] %v497
        %602 = vst [vmem:[%s217 + $0x1b0] sm:$0xff] %v498
        %603 = vst [vmem:[%s217 + $0x1b8] sm:$0xff] %v499
        %604 = vst [vmem:[%s217 + $0x1c0] sm:$0xff] %v500
        %605 = vst [vmem:[%s217 + $0x1c8] sm:$0xff] %v501
        %606 = vst [vmem:[%s217 + $0x1d0] sm:$0xff] %v502
        %607 = vst [vmem:[%s217 + $0x1d8] sm:$0xff] %v503
        %608 = vst [vmem:[%s217 + $0x1e0] sm:$0xff] %v504
        %609 = vst [vmem:[%s217 + $0x1e8] sm:$0xff] %v505
        %610 = vst [vmem:[%s217 + $0x1f0] sm:$0xff] %v506
        %611 = vst [vmem:[%s217 + $0x1f8] sm:$0xff] %v507
        %612 = vst [vmem:[%s217 + $0x200] sm:$0xff] %v508
        %613 = vst [vmem:[%s217 + $0x208] sm:$0xff] %v509
        %614 = vst [vmem:[%s217 + $0x210] sm:$0xff] %v510
        %615 = vst [vmem:[%s217 + $0x218] sm:$0xff] %v511
        %616 = vst [vmem:[%s217 + $0x220] sm:$0xff] %v512
        %617 = vst [vmem:[%s217 + $0x228] sm:$0xff] %v513
        %618 = vst [vmem:[%s217 + $0x230] sm:$0xff] %v514
        %619 = vst [vmem:[%s217 + $0x238] sm:$0xff] %v515
        %620 = vst [vmem:[%s217 + $0x240] sm:$0xff] %v516
        %621 = vst [vmem:[%s217 + $0x248] sm:$0xff] %v517
        %622 = vst [vmem:[%s217 + $0x250] sm:$0xff] %v518
        %623 = vst [vmem:[%s217 + $0x258] sm:$0xff] %v519
        %624 = vst [vmem:[%s217 + $0x260] sm:$0xff] %v520
        %625 = vst [vmem:[%s217 + $0x268] sm:$0xff] %v521
        %626 = vst [vmem:[%s217 + $0x270] sm:$0xff] %v522
        %627 = vst [vmem:[%s217 + $0x278] sm:$0xff] %v523
        %628 = vst [vmem:[%s217 + $0x280] sm:$0xff] %v524
        %629 = vst [vmem:[%s217 + $0x288] sm:$0xff] %v525
        %630 = vst [vmem:[%s217 + $0x290] sm:$0xff] %v526
        %631 = vst [vmem:[%s217 + $0x298] sm:$0xff] %v527
        %632 = vst [vmem:[%s217 + $0x2a0] sm:$0xff] %v528
        %633 = vst [vmem:[%s217 + $0x2a8] sm:$0xff] %v529
        %634 = vst [vmem:[%s217 + $0x2b0] sm:$0xff] %v530
        %635 = vst [vmem:[%s217 + $0x2b8] sm:$0xff] %v531
        %636 = vst [vmem:[%s217 + $0x2c0] sm:$0xff] %v532
        %637 = vst [vmem:[%s217 + $0x2c8] sm:$0xff] %v533
        %638 = vst [vmem:[%s217 + $0x2d0] sm:$0xff] %v534
        %639 = vst [vmem:[%s217 + $0x2d8] sm:$0xff] %v535
        %640 = vst [vmem:[%s217 + $0x2e0] sm:$0xff] %v536
        %641 = vst [vmem:[%s217 + $0x2e8] sm:$0xff] %v537
        %642 = vst [vmem:[%s217 + $0x2f0] sm:$0xff] %v538
        %643 = vst [vmem:[%s217 + $0x2f8] sm:$0xff] %v539
        %644 = vst [vmem:[%s217 + $0x300] sm:$0xff] %v540
        %645 = vst [vmem:[%s217 + $0x308] sm:$0xff] %v541
        %646 = vst [vmem:[%s217 + $0x310] sm:$0xff] %v542
        %647 = vst [vmem:[%s217 + $0x318] sm:$0xff] %v543
        %648 = vst [vmem:[%s217 + $0x320] sm:$0xff] %v544
        %649 = vst [vmem:[%s217 + $0x328] sm:$0xff] %v545
        %650 = vst [vmem:[%s217 + $0x330] sm:$0xff] %v546
        %651 = vst [vmem:[%s217 + $0x338] sm:$0xff] %v547
        %s652 = sand.u32 %s82, 1
        %s653 = scalar_lea.sflag [#allocation4], %s652
        %s654 = sand.u32 %s82, 1
        %s655 = smul.addr %s654, 832
        %s656 = scalar_lea.vmem [#allocation7], %s655
        // Predicated region
        $region37: #{tpu_custom_call.1} parent=27 // pred_check
          %p657 = pneg %p92
        $region38: #{tpu_custom_call.1} parent=27 // pred_check_branch
          %659 = sbr.rel (%p657) target = $region40
        $region39: #{tpu_custom_call.1} parent=27 // pred_region
          %s660 = smul.u32 13, %s22
          %s661 = ssub.s32 49, %s660
          %p662 = scmp.lt.s32.totalorder %s661, 13
          %s663 = scalar_select %p662, %s661, 13
          %s664 = smul.u32 128, %s663
          %s665 = smul.u32 %s664, 8
          %s667 = ssub.s32 13312, %s665
          %668 = vsyncadd %s653, %s667
          %p669 = scmp.ne.s32.totalorder 0, %s665
          %s670 = smul.addr %s660, 8
          %s671 = smul.addr %s670, 128
          %s672 = scalar_lea.hbm %s2, %s671
          %s673 = smul.u32 64, %s663
          %s674 = sshll.u32 %s656, 4
          %s675 = int_to_ptr.vmem [resolvable:$true] %s674
          %s676 = sshll.u32 %s673, 4
          %680 = dma.vmem_to_hbm [thread:$0]  (%p669), %s675, %s676, %s672, %s653, 1024, 1024, 64
        $region40: #{tpu_custom_call.1} parent=27 // pred_fallthru
          _
      $region28: #{tpu_custom_call.1} parent=5 // pred_fallthru
        _
      %p681 = scmp.le.s32.totalorder 2, %s17
      // Predicated region
      $region41: #{tpu_custom_call.1} parent=5 // pred_check
        %p682 = pneg %p681
      $region42: #{tpu_custom_call.1} parent=5 // pred_check_branch
        %684 = sbr.rel (%p682) target = $region44
      $region43: #{tpu_custom_call.1} parent=5 // pred_region
        %s685 = ssub.s32 %s17, 2
        // Predicated region
        $region45: #{tpu_custom_call.1} parent=43 // pred_check
          %p686 = pneg %p98
        $region46: #{tpu_custom_call.1} parent=43 // pred_check_branch
          %688 = sbr.rel (%p686) target = $region48
        $region47: #{tpu_custom_call.1} parent=43 // pred_region
          %s689 = sand.u32 %s83, 1
          %s690 = scalar_lea.sflag [#allocation4], %s689
          %s691 = sand.u32 %s83, 1
          %s692 = smul.addr %s691, 832
          %s693 = scalar_lea.vmem [#allocation7], %s692
          %694 = dma.done %s690, 13312
        $region48: #{tpu_custom_call.1} parent=43 // pred_fallthru
          _
      $region44: #{tpu_custom_call.1} parent=5 // pred_fallthru
        _
    $region6: #{tpu_custom_call.1} parent=1 // loop_footer
      %s21 = sadd.s32 1, %s17
    $region7: #{tpu_custom_call.1} parent=1 // loop_footer_branch
      %16 = sbr.rel target = $region3
    $region8: #{tpu_custom_call.1} parent=1 // loop_exit
      _
    %695 = vsyncpa [#allocation3], 1
    %s696 = scalar_lea.sflag [#allocation3], 1
    %697 = vsyncpa %s696, 1
    %698 = vsyncpa [#allocation6], 1
    %s699 = scalar_lea.sflag [#allocation6], 1
    %700 = vsyncpa %s699, 1
    %701 = vsyncpa [#allocation4], 1
    %s702 = scalar_lea.sflag [#allocation4], 1
    %703 = vsyncpa %s702, 1

</llo_original>
